<compile_context>
chip_gen: v7x
topology: tpu7x:2x2x1
jax: 0.10.0
libtpu: 0.0.40
codegen_flags: <defaults>
</compile_context>

<pallas_src>
import functools

import jax
import jax.numpy as jnp
from jax import lax
from jax.experimental import pallas as pl
from jax.experimental.pallas import tpu as pltpu

_EPS = 1e-6     # F.pairwise_distance default eps (added to the difference)
_LANE = 128


def _round_up(x, m):
    return -(-x // m) * m


def _tpu_kind():
    try:
        return jax.devices()[0].device_kind.lower()
    except Exception:
        return ""


def _contrastive_kernel(x1_ref, x2_ref, lab_ref, out_ref, acc_ref, *,
                        margin, batch, tile_b, chunk, tiles_per_split,
                        needs_mask):
    c = pl.program_id(0)              # batch-split ("parallel") axis
    i = pl.program_id(1)              # streaming / reduction axis ("arbitrary")

    @pl.when(i == 0)
    def _():
        acc_ref[...] = jnp.zeros_like(acc_ref)

    block_row0 = (c * tiles_per_split + i) * tile_b
    n_chunks = tile_b // chunk        # static

    def chunk_body(j, carry):
        off = pl.multiple_of(j * chunk, chunk)
        # Stream in native dtype, upcast in-kernel (VALU slot is free here).
        x1 = x1_ref[pl.ds(off, chunk), :].astype(jnp.float32)    # (chunk, D)
        x2 = x2_ref[pl.ds(off, chunk), :].astype(jnp.float32)    # (chunk, D)
        lab = lab_ref[pl.ds(off, chunk), :].astype(jnp.float32)  # (chunk, 1)

        diff = x1 - x2 + _EPS
        d2 = jnp.sum(diff * diff, axis=-1, keepdims=True)        # (chunk, 1)
        dist = jnp.sqrt(d2)
        hinge = jnp.maximum(margin - dist, 0.0)
        per_pair = (1.0 - lab) * d2 + lab * (hinge * hinge)

        if needs_mask:
            # Rows beyond the real batch (partial edge blocks / clamped
            # duplicate blocks) contribute exactly zero.  Select is NaN-safe.
            rows = (block_row0 + off
                    + lax.broadcasted_iota(jnp.int32, (chunk, 1), 0))
            per_pair = jnp.where(rows < batch, per_pair, 0.0)

        acc_ref[...] += per_pair
        return carry

    lax.fori_loop(0, n_chunks, chunk_body, 0)

    @pl.when(i == pl.num_programs(1) - 1)
    def _():
        # Each split writes its share of sum/B; the wrapper sums the splits.
        out_ref[0, 0] = jnp.sum(acc_ref[...]) * (1.0 / batch)


def contrastive_loss(output1, output2, label, margin=2.0, *,
                     nsplit=None, max_tile_rows=None):
    assert output1.shape == output2.shape and output1.ndim == 2
    B, D = output1.shape
    if label.ndim == 1:
        label = label[:, None]
    assert label.shape == (B, 1)

    kind = _tpu_kind()
    if nsplit is None:
        nsplit = 2 if "v7" in kind else 1          # only v7x has 2 TCs per chip

    # Generation-specific VMEM budget + explicit scoped-VMEM limit.
    if "v7" in kind:                                # 64 MiB physical VMEM / TC
        vmem_limit = 52 * 1024 * 1024
        vmem_budget = 44 * 1024 * 1024
    elif "v5" in kind or "v6" in kind:              # 128 MiB physical VMEM
        vmem_limit = 64 * 1024 * 1024
        vmem_budget = 56 * 1024 * 1024
    else:                                           # unknown: stay under defaults
        vmem_limit = None
        vmem_budget = 12 * 1024 * 1024

    # Tiny batches: pad up to one sublane tile (8 rows, negligible cost) so no
    # block's sublane extent exceeds the array.  Larger ragged batches are NOT
    # padded -- partial edge blocks are masked in-kernel.
    if B < 8:
        pad = ((0, 8 - B), (0, 0))
        output1 = jnp.pad(output1, pad)
        output2 = jnp.pad(output2, pad)
        label = jnp.pad(label, pad)
    B_arr = output1.shape[0]

    in_item = jnp.dtype(output1.dtype).itemsize
    lab_item = jnp.dtype(label.dtype).itemsize
    d_pad = _round_up(D, _LANE)                     # minor dim pads to 128 lanes

    # Compute-chunk rows: keep per-chunk f32 temporaries at ~0.5 MiB each.
    chunk = max(8, min(1024, ((512 * 1024) // (d_pad * 4)) // 8 * 8))

    # DMA-tile rows: strictly by lane-padded VMEM bytes (double-buffered inputs
    # + double-buffered 128-lane-padded label column), with fixed headroom for
    # the accumulator and in-kernel temporaries.
    per_row = (2 * 2 * d_pad * in_item              # x1, x2 blocks, 2 buffers each
               + 2 * _LANE * lab_item)              # label column, 2 buffers
    usable = max(1 << 20, vmem_budget - (6 << 20))
    tile_b = (usable // per_row) // 8 * 8
    if max_tile_rows is not None:                   # test/tuning override
        tile_b = min(tile_b, max(8, max_tile_rows // 8 * 8))
    tile_b = int(max(8, min(tile_b, (B_arr // 8) * 8)))
    if tile_b <= chunk:
        chunk = tile_b
    else:
        tile_b = (tile_b // chunk) * chunk
    chunk = int(chunk)

    tiles_total = -(-B_arr // tile_b)
    nsplit = int(max(1, min(nsplit, tiles_total)))
    tiles_per_split = -(-tiles_total // nsplit)
    # If the split grid covers more blocks than exist, clamp the extras onto the
    # last real block (their rows are >= B, so the mask zeroes them).
    clamp_blocks = nsplit * tiles_per_split > tiles_total
    needs_mask = nsplit * tiles_per_split * tile_b > B

    def block_idx(c, i):
        idx = c * tiles_per_split + i
        if clamp_blocks:
            idx = jnp.minimum(idx, tiles_total - 1)
        return idx

    kernel = functools.partial(
        _contrastive_kernel, margin=float(margin), batch=B, tile_b=tile_b,
        chunk=chunk, tiles_per_split=tiles_per_split, needs_mask=needs_mask)

    cp_kwargs = dict(dimension_semantics=("parallel", "arbitrary"))
    if vmem_limit is not None:
        cp_kwargs["vmem_limit_bytes"] = vmem_limit

    partial_sums = pl.pallas_call(
        kernel,
        out_shape=jax.ShapeDtypeStruct((nsplit, 1), jnp.float32),
        grid=(nsplit, tiles_per_split),
        in_specs=[
            pl.BlockSpec((tile_b, D), lambda c, i: (block_idx(c, i), 0)),
            pl.BlockSpec((tile_b, D), lambda c, i: (block_idx(c, i), 0)),
            pl.BlockSpec((tile_b, 1), lambda c, i: (block_idx(c, i), 0)),
        ],
        out_specs=pl.BlockSpec((1, 1), lambda c, i: (c, 0),
                               memory_space=pltpu.MemorySpace.SMEM),
        scratch_shapes=[pltpu.VMEM((chunk, 1), jnp.float32)],
        compiler_params=pltpu.CompilerParams(**cp_kwargs),
    )(output1, output2, label)

    return jnp.sum(partial_sums)


def _reference(output1, output2, label, margin=2.0):
    o1 = output1.astype(jnp.float32)
    o2 = output2.astype(jnp.float32)
    lab = label.astype(jnp.float32)
    d = jnp.sqrt(jnp.sum(jnp.square(o1 - o2 + _EPS), axis=-1, keepdims=True))
    return jnp.mean((1.0 - lab) * jnp.square(d)
                    + lab * jnp.square(jnp.maximum(margin - d, 0.0)))


if __name__ == "__main__":
    key = jax.random.PRNGKey(0)

    def _check(B, D, *, nsplit=None, max_tile_rows=None, tag=""):
        k1, k2, k3 = jax.random.split(jax.random.fold_in(key, B * 131 + D), 3)
        o1 = jax.random.normal(k1, (B, D), dtype=jnp.float32)
        o2 = jax.random.normal(k2, (B, D), dtype=jnp.float32)
        lab = jax.random.bernoulli(k3, 0.5, (B, 1)).astype(jnp.float32)
        got = jax.block_until_ready(
            contrastive_loss(o1, o2, lab, margin=2.0,
                             nsplit=nsplit, max_tile_rows=max_tile_rows))
        want = _reference(o1, o2, lab, margin=2.0)
        assert jnp.allclose(got, want, rtol=1e-5, atol=1e-5), (tag, got, want)

    # Small embedding pairs, as the forward implies.
    _check(8, 32, tag="base")
    # Ragged batch -> partial edge block + in-kernel mask (no wrapper pad copy).
    _check(10, 32, tag="ragged")
    # Multi-tile streaming + in-block chunk loop + partial edge block.
    _check(2500, 160, max_tile_rows=1024, tag="stream")
    # Explicit 2-way split (v7x path): exercises clamped duplicate blocks.
    _check(2500, 160, nsplit=2, max_tile_rows=1024, tag="split")

    print("KERNEL_OK")
</pallas_src>

<mosaic_0001>
module attributes {stable_mosaic.version = 11 : i64} {
  func.func @_contrastive_kernel(%arg0: i32, %arg1: i32, %arg2: memref<8x32xf32, #tpu.memory_space<vmem>>, %arg3: memref<8x32xf32, #tpu.memory_space<vmem>>, %arg4: memref<8x1xf32, #tpu.memory_space<vmem>>, %arg5: memref<1x1xf32, #tpu.memory_space<smem>>, %arg6: memref<8x1xf32, #tpu.memory_space<vmem>>) attributes {dimension_semantics = [#tpu.dimension_semantics<parallel>, #tpu.dimension_semantics<arbitrary>], iteration_bounds = array<i64: 1, 1>, scalar_prefetch = 0 : i64, scratch_operands = 1 : i64, tpu.core_type = #tpu.core_type<tc>, window_params = [{transform_indices = @transform_0, window_bounds = array<i64: 8, 32>}, {transform_indices = @transform_1, window_bounds = array<i64: 8, 32>}, {transform_indices = @transform_2, window_bounds = array<i64: 8, 1>}, {transform_indices = @transform_3, window_bounds = array<i64: 1, 1>}]} {
    %c0_i32 = arith.constant 0 : i32
    %0 = arith.cmpi eq, %arg1, %c0_i32 : i32
    %1 = arith.extui %0 : i1 to i32
    %c0_i32_0 = arith.constant 0 : i32
    %2 = arith.cmpi ne, %1, %c0_i32_0 : i32
    scf.if %2 {
      %cst_14 = arith.constant 0.000000e+00 : f32
      %34 = vector.broadcast %cst_14 : f32 to vector<8x1xf32>
      %c0_15 = arith.constant 0 : index
      %c0_16 = arith.constant 0 : index
      %35 = vector.load %arg6[%c0_15, %c0_16] : memref<8x1xf32, #tpu.memory_space<vmem>>, vector<8x1xf32>
      tpu.vector_store %arg6[%c0_15, %c0_16], %34 {strides = array<i32>} : memref<8x1xf32, #tpu.memory_space<vmem>>, vector<8x1xf32>,
    } else {
    }
    %c0_i32_1 = arith.constant 0 : i32
    %c8_i32 = arith.constant 8 : i32
    %3 = arith.muli %c0_i32_1, %c8_i32 : i32
    %4 = tpu.assume_multiple %3, 8 : i32
    %5 = arith.index_cast %4 : i32 to index
    %c0 = arith.constant 0 : index
    %6 = vector.load %arg2[%5, %c0] : memref<8x32xf32, #tpu.memory_space<vmem>>, vector<8x32xf32>
    %7 = arith.index_cast %4 : i32 to index
    %c0_2 = arith.constant 0 : index
    %8 = vector.load %arg3[%7, %c0_2] : memref<8x32xf32, #tpu.memory_space<vmem>>, vector<8x32xf32>
    %9 = arith.index_cast %4 : i32 to index
    %c0_3 = arith.constant 0 : index
    %10 = vector.load %arg4[%9, %c0_3] : memref<8x1xf32, #tpu.memory_space<vmem>>, vector<8x1xf32>
    %11 = arith.subf %6, %8 : vector<8x32xf32>
    %cst = arith.constant 9.99999997E-7 : f32
    %12 = vector.broadcast %cst : f32 to vector<8x32xf32>
    %13 = arith.addf %11, %12 : vector<8x32xf32>
    %14 = arith.mulf %13, %13 : vector<8x32xf32>
    %cst_4 = arith.constant dense<0.000000e+00> : vector<8xf32>
    %15 = vector.multi_reduction <add>, %14, %cst_4 [1] : vector<8x32xf32> to vector<8xf32>
    %16 = vector.shape_cast %15 : vector<8xf32> to vector<8x1xf32>
    %17 = math.sqrt %16 : vector<8x1xf32>
    %cst_5 = arith.constant 2.000000e+00 : f32
    %18 = vector.broadcast %cst_5 : f32 to vector<8x1xf32>
    %19 = arith.subf %18, %17 : vector<8x1xf32>
    %cst_6 = arith.constant 0.000000e+00 : f32
    %20 = vector.broadcast %cst_6 : f32 to vector<8x1xf32>
    %21 = arith.maximumf %19, %20 : vector<8x1xf32>
    %cst_7 = arith.constant 1.000000e+00 : f32
    %22 = vector.broadcast %cst_7 : f32 to vector<8x1xf32>
    %23 = arith.subf %22, %10 : vector<8x1xf32>
    %24 = arith.mulf %23, %16 : vector<8x1xf32>
    %25 = arith.mulf %21, %21 : vector<8x1xf32>
    %26 = arith.mulf %10, %25 : vector<8x1xf32>
    %27 = arith.addf %24, %26 : vector<8x1xf32>
    %c0_8 = arith.constant 0 : index
    %c0_9 = arith.constant 0 : index
    %28 = vector.load %arg6[%c0_8, %c0_9] : memref<8x1xf32, #tpu.memory_space<vmem>>, vector<8x1xf32>
    %29 = arith.addf %28, %27 : vector<8x1xf32>
    %c0_10 = arith.constant 0 : index
    %c0_11 = arith.constant 0 : index
    %30 = vector.load %arg6[%c0_10, %c0_11] : memref<8x1xf32, #tpu.memory_space<vmem>>, vector<8x1xf32>
    tpu.vector_store %arg6[%c0_10, %c0_11], %29 {strides = array<i32>} : memref<8x1xf32, #tpu.memory_space<vmem>>, vector<8x1xf32>,
    %c1_i32 = arith.constant 1 : i32
    %c0_i32_12 = arith.constant 0 : i32
    %31 = arith.cmpi eq, %arg1, %c0_i32_12 : i32
    %32 = arith.extui %31 : i1 to i32
    %c0_i32_13 = arith.constant 0 : i32
    %33 = arith.cmpi ne, %32, %c0_i32_13 : i32
    scf.if %33 {
      %c0_14 = arith.constant 0 : index
      %c0_15 = arith.constant 0 : index
      %34 = vector.load %arg6[%c0_14, %c0_15] : memref<8x1xf32, #tpu.memory_space<vmem>>, vector<8x1xf32>
      %35 = vector.shape_cast %34 : vector<8x1xf32> to vector<1x8x1xf32>
      %cst_16 = arith.constant dense<0.000000e+00> : vector<1xf32>
      %36 = vector.multi_reduction <add>, %35, %cst_16 [1, 2] : vector<1x8x1xf32> to vector<1xf32>
      %37 = vector.shape_cast %36 : vector<1xf32> to vector<1x1x1xf32>
      %38 = vector.extract %37[0, 0, 0] : f32 from vector<1x1x1xf32>
      %cst_17 = arith.constant 1.250000e-01 : f32
      %39 = arith.mulf %38, %cst_17 : f32
      %c0_18 = arith.constant 0 : index
      %c0_19 = arith.constant 0 : index
      %40 = memref.load %arg5[%c0_18, %c0_19] : memref<1x1xf32, #tpu.memory_space<smem>>
      memref.store %39, %arg5[%c0_18, %c0_19] : memref<1x1xf32, #tpu.memory_space<smem>>
    } else {
    }
    return
  }
  func.func @transform_0(%arg0: i32, %arg1: i32) -> (i32, i32) {
    %c1_i32 = arith.constant 1 : i32
    %0 = arith.muli %arg0, %c1_i32 : i32
    %1 = arith.addi %0, %arg1 : i32
    %c0_i32 = arith.constant 0 : i32
    %c0_i32_0 = arith.constant 0 : i32
    return %1, %c0_i32 : i32, i32
  }
  func.func @transform_1(%arg0: i32, %arg1: i32) -> (i32, i32) {
    %c1_i32 = arith.constant 1 : i32
    %0 = arith.muli %arg0, %c1_i32 : i32
    %1 = arith.addi %0, %arg1 : i32
    %c0_i32 = arith.constant 0 : i32
    %c0_i32_0 = arith.constant 0 : i32
    return %1, %c0_i32 : i32, i32
  }
  func.func @transform_2(%arg0: i32, %arg1: i32) -> (i32, i32) {
    %c1_i32 = arith.constant 1 : i32
    %0 = arith.muli %arg0, %c1_i32 : i32
    %1 = arith.addi %0, %arg1 : i32
    %c0_i32 = arith.constant 0 : i32
    %c0_i32_0 = arith.constant 0 : i32
    return %1, %c0_i32 : i32, i32
  }
  func.func @transform_3(%arg0: i32, %arg1: i32) -> (i32, i32) {
    %c0_i32 = arith.constant 0 : i32
    %c0_i32_0 = arith.constant 0 : i32
    return %arg0, %c0_i32 : i32, i32
  }
}

</mosaic_0001>

<llo_original>
// kernel: tpu_custom_call.1
$region0: #{tpu_custom_call.1}
  #allocation0 [shape = 'u32[]', space=smem, size = 0x4, offset = 0x4, fixed_abs, tag = 'smem constant byte address 0x4 - core index']
  #allocation1 [shape = 'u32[144,128]{1,0:T(1,128)}', space=vmem, size = 0x12000, scoped, tag = 'internal scratch']
  #allocation2 [shape = 'f32[8,1]{1,0:T(8,128)}', space=vmem, size = 0x1000, scoped, tag = 'scratch operand']
  %s0 = inlined_call_operand.vmem [shape: f32[8,32], index: 0, kind: input, shape index: {}]
  %s1 = inlined_call_operand.hbm [shape: f32[8,32], index: 1, kind: input, shape index: {}]
  %s2 = inlined_call_operand.vmem [shape: f32[8,1], index: 2, kind: input, shape index: {}]
  %s3 = inlined_call_operand.hbm [shape: f32[1,1], index: 3, kind: output, shape index: {}]
  %s4 = sld [smem:[#allocation0]]
  $region34: #{tpu_custom_call.1} parent=0
    _
  %s6 = ssub.s32 1, %s4
  %s7 = scalar_select 0, %s6, %s4
  $region1: #{tpu_custom_call.1} parent=0
    #allocation3 [shape = 'u8[4096]{0}', space=vmem, size = 0x1000, scoped, tag = 'input window, operand 1, single buffered']
    #allocation4 [shape = 's32[1]{0}', space=sflag, size = 0x4, scoped, tag = 'scoped memory for tpu_custom_call.1']
    #allocation5 [shape = 's32[1]{0}', space=sflag, size = 0x4, scoped, tag = 'scoped memory for tpu_custom_call.1']
    #allocation6 [shape = 'u8[512]{0}', space=smem, size = 0x200, scoped, tag = 'output window, operand 0, single buffered']
    %8 = vsyncpa [#allocation4], 0
    %9 = vsyncpa [#allocation5], 0
    // Predicated region
    $region2: #{tpu_custom_call.1} parent=1 // pred_check
      _
    $region3: #{tpu_custom_call.1} parent=1 // pred_check_branch
      %11 = sbr.rel (0) target = $region5
    $region4: #{tpu_custom_call.1} parent=1 // pred_region
      %s12 = sadd.s32 0, 0
      %p13 = scmp.lt.s32.totalorder %s12, 0
      %s14 = scalar_select %p13, %s12, 0
      %s15 = smul.addr %s14, 8
      %s16 = scalar_lea.vmem %s0, %s15
      %s17 = sadd.s32 0, 0
    $region5: #{tpu_custom_call.1} parent=1 // pred_fallthru
      _
    // Predicated region
    $region6: #{tpu_custom_call.1} parent=1 // pred_check
      _
    $region7: #{tpu_custom_call.1} parent=1 // pred_check_branch
      %19 = sbr.rel (0) target = $region9
    $region8: #{tpu_custom_call.1} parent=1 // pred_region
      %s20 = sadd.s32 0, 0
      %s22 = ssub.s32 128, 128
      %23 = vsyncadd [#allocation4], %s22
      %s24 = smul.addr %s20, 128
      %s25 = scalar_lea.hbm %s1, %s24
      %s27 = sshll.u32 [#allocation3], 4
      %s28 = int_to_ptr.vmem [resolvable:$true] %s27
      %30 = dma.hbm_to_vmem [thread:$0]  %s25, 128, %s28, [#allocation4]
    $region9: #{tpu_custom_call.1} parent=1 // pred_fallthru
      _
    // Predicated region
    $region10: #{tpu_custom_call.1} parent=1 // pred_check
      _
    $region11: #{tpu_custom_call.1} parent=1 // pred_check_branch
      %32 = sbr.rel (0) target = $region13
    $region12: #{tpu_custom_call.1} parent=1 // pred_region
      %s33 = sadd.s32 0, 0
      %p34 = scmp.lt.s32.totalorder %s33, 0
      %s35 = scalar_select %p34, %s33, 0
      %s36 = smul.addr %s35, 8
      %s37 = scalar_lea.vmem %s2, %s36
      %s38 = sadd.s32 0, 0
    $region13: #{tpu_custom_call.1} parent=1 // pred_fallthru
      _
    // Predicated region
    $region14: #{tpu_custom_call.1} parent=1 // pred_check
      _
    $region15: #{tpu_custom_call.1} parent=1 // pred_check_branch
      %40 = sbr.rel (0) target = $region17
    $region16: #{tpu_custom_call.1} parent=1 // pred_region
      %41 = dma.done [#allocation4], 128
    $region17: #{tpu_custom_call.1} parent=1 // pred_fallthru
      _
    %s42 = sadd.s32 0, 0
    %p43 = scmp.lt.s32.totalorder %s42, 0
    %s44 = scalar_select %p43, %s42, 0
    %s45 = smul.addr %s44, 8
    %s46 = scalar_lea.vmem %s0, %s45
    %s47 = sadd.s32 0, 0
    %p48 = scmp.lt.s32.totalorder %s47, 0
    %s49 = scalar_select %p48, %s47, 0
    %s50 = smul.addr %s49, 8
    %s51 = scalar_lea.vmem %s2, %s50
    %s52 = sadd.s32 0, 0
    %p53 = scmp.lt.s32.totalorder %s52, 0
    %s54 = scalar_select %p53, %s52, 0
    %s55 = smul.addr %s54, 8
    %s56 = scalar_lea.vmem %s0, %s55
    %s57 = sadd.s32 0, 0
    %s58 = sadd.s32 0, 0
    %s59 = sadd.s32 0, 0
    %p60 = scmp.lt.s32.totalorder %s59, 0
    %s61 = scalar_select %p60, %s59, 0
    %s62 = smul.addr %s61, 8
    %s63 = scalar_lea.vmem %s2, %s62
    %s64 = sadd.s32 0, 0
    %p65 = scmp.eq.s32.totalorder 0, 0
    // Predicated region
    $region18: #{tpu_custom_call.1} parent=1 // pred_check
      %p66 = pneg %p65
    $region19: #{tpu_custom_call.1} parent=1 // pred_check_branch
      %68 = sbr.rel (%p66) target = $region21
    $region20: #{tpu_custom_call.1} parent=1 // pred_region
      %vm69 = vcmask 7168
      %70 = vst.msk [vmem:[#allocation2] sm:$0xff] %vm69, 0.0
    $region21: #{tpu_custom_call.1} parent=1 // pred_fallthru
      _
    %v71 = vld [vmem:[%s56] sm:$0xff]
    %v72 = vld [vmem:[#allocation3] sm:$0xff]
    %v73 = vld [vmem:[%s63] sm:$0xff]
    %v74 = vsub.f32 %v71, %v72
    %v75 = vadd.f32 %v74, 1e-06
    %v76 = vmul.f32 %v75, %v75
    %vm77 = vcmask 261120
    %v78 = vsel %vm77, %v76, 0.0
    %79 = vadd.xlane.f32.xlu0 %v78
    %v80 = vpop.xlane.xlu0 %79
    %v81 = vrsqrt.pop %v80
    %v82 = vmul.f32 %v80, %v81
    %vm83 = vcmp.eq.f32.partialorder %v80, inf
    %v84 = vsel %vm83, %v80, %v82
    %vm85 = vcmp.eq.f32.partialorder %v80, 0.0
    %v86 = vand.u32 %v80, 2147483648
    %v87 = vsel %vm85, %v86, %v84
    %v88 = vsub.f32 2.0, %v87
    %v89 = vmax.f32 %v88, 0.0
    %v90 = vsub.f32 1.0, %v73
    %v91 = vmul.f32 %v90, %v80
    %v92 = vmul.f32 %v89, %v89
    %v93 = vmul.f32 %v73, %v92
    %v94 = vadd.f32 %v91, %v93
    %v95 = vld [vmem:[#allocation2] sm:$0xff]
    %v96 = vadd.f32 %v95, %v94
    %vm97 = vcmask 7168
    %98 = vst.msk [vmem:[#allocation2] sm:$0xff] %vm97, %v96
    // Predicated region
    $region22: #{tpu_custom_call.1} parent=1 // pred_check
      %p99 = pneg %p65
    $region23: #{tpu_custom_call.1} parent=1 // pred_check_branch
      %101 = sbr.rel (%p99) target = $region25
    $region24: #{tpu_custom_call.1} parent=1 // pred_region
      %v102 = vld [vmem:[#allocation2] sm:$0xff]
      %v103 = vsel %vm97, %v102, 0.0
      %104 = vadd.xlane.f32.xlu0 %v103
      %v105 = vpop.xlane.xlu0 %104
      %v106 = vrot.slane %v105, 4
      %v107 = vadd.f32 %v105, %v106
      %v108 = vrot.slane %v107, 2
      %v109 = vadd.f32 %v107, %v108
      %v110 = vrot.slane %v109, 1
      %v111 = vadd.f32 %v109, %v110
      %s112 = vtos %v111
      %s113 = smul.f32 %s112, 0.125
      %s114 = scalar_lea.smem [#allocation6], 0
      %115 = sst [smem:[%s114]] %s113
    $region25: #{tpu_custom_call.1} parent=1 // pred_fallthru
      _
    // Predicated region
    $region26: #{tpu_custom_call.1} parent=1 // pred_check
      _
    $region27: #{tpu_custom_call.1} parent=1 // pred_check_branch
      %117 = sbr.rel (0) target = $region29
    $region28: #{tpu_custom_call.1} parent=1 // pred_region
      %s119 = ssub.s32 16, 16
      %120 = vsyncadd [#allocation5], %s119
      %123 = dma.smem_to_hbm [#allocation6], 16, %s3, [#allocation5]
    $region29: #{tpu_custom_call.1} parent=1 // pred_fallthru
      _
    // Predicated region
    $region30: #{tpu_custom_call.1} parent=1 // pred_check
      _
    $region31: #{tpu_custom_call.1} parent=1 // pred_check_branch
      %125 = sbr.rel (0) target = $region33
    $region32: #{tpu_custom_call.1} parent=1 // pred_region
      %126 = dma.done [#allocation5], 16
    $region33: #{tpu_custom_call.1} parent=1 // pred_fallthru
      _
    %127 = sfence
    %128 = vsyncpa [#allocation4], 1
    %129 = vsyncpa [#allocation5], 1

</llo_original>
